<compile_context>
chip_gen: v7x
topology: tpu7x:2x2x1
jax: 0.10.0
libtpu: 0.0.40
codegen_flags: <defaults>
</compile_context>

<pallas_src>
import functools

import numpy as np

import jax
import jax.numpy as jnp
from jax import lax
from jax.experimental import pallas as pl
from jax.experimental.pallas import tpu as pltpu


def _bilinear_interp_matrix(out_size: int, in_size: int) -> np.ndarray:
    """Row-interpolation matrix M (out_size, in_size) such that y = M @ x
    reproduces torch.nn.functional.interpolate(mode='bilinear',
    align_corners=False) along one axis. Built with numpy so it is a
    compile-time constant under jit."""
    scale = in_size / out_size
    i = np.arange(out_size, dtype=np.float64)
    src = np.maximum((i + 0.5) * scale - 0.5, 0.0)   # torch clamps negative src to 0
    x0 = np.floor(src)
    lam = (src - x0).astype(np.float32)
    x0i = np.minimum(x0.astype(np.int64), in_size - 1)
    x1i = np.minimum(x0i + 1, in_size - 1)
    m = np.zeros((out_size, in_size), dtype=np.float32)
    rows = np.arange(out_size)
    np.add.at(m, (rows, x0i), 1.0 - lam)
    np.add.at(m, (rows, x1i), lam)
    return m


def _semantic_loss_kernel(feat_ref, c_ref, rbd_ref, emb_ref, out_ref):
    # Separable bilinear resize: two small MXU contractions (no dense Kronecker op).
    tmp = jnp.dot(feat_ref[...], c_ref[...], preferred_element_type=jnp.float32)   # (B*S, D)
    resized = jnp.dot(rbd_ref[...], tmp, preferred_element_type=jnp.float32)       # (B*T, D)
    emb = emb_ref[0]                                                                # (B*T, D)

    # Per-(b, t) reductions over the feature dim D (lane axis).
    dots = jnp.sum(resized * emb, axis=-1, keepdims=True)       # (B*T, 1)
    n1sq = jnp.sum(resized * resized, axis=-1, keepdims=True)   # (B*T, 1)
    n2sq = jnp.sum(emb * emb, axis=-1, keepdims=True)           # (B*T, 1)

    # torch cosine_similarity: dot / max(||a|| * ||b||, eps), eps = 1e-8.
    # Single EUP rsqrt on the clamped product of squared norms.
    inv = lax.rsqrt(jnp.maximum(n1sq * n2sq, jnp.float32(1e-16)))

    # loss_mask is all-ones in the reference forward -> plain sum of (1 - cos).
    out_ref[0] = jnp.sum(1.0 - dots * inv, keepdims=True)       # (1, 1) store


@jax.jit
def _semantic_loss_sums(semantic_features: jnp.ndarray,
                        audio_embeds_stack: jnp.ndarray) -> jnp.ndarray:
    """semantic_features: (B, S, W) f32; audio_embeds_stack: (N, B, T, D) f32.
    Returns (N,) f32 of per-entry sums of (1 - cosine_similarity)."""
    B, S, W = semantic_features.shape
    N, B2, T, D = audio_embeds_stack.shape
    assert B2 == B

    # Compile-time constant operators (constant-fold under jit).
    r = _bilinear_interp_matrix(T, S)                            # (T, S)  length resize
    c = _bilinear_interp_matrix(D, W).T                          # (W, D)  feature resize
    r_bd = np.kron(np.eye(B, dtype=np.float32), r)               # (B*T, B*S) block-diag

    feat_flat = semantic_features.reshape(B * S, W)              # (B*S, W)
    emb_flat = audio_embeds_stack.reshape(N, B * T, D)           # (N, B*T, D)

    cost = pl.CostEstimate(
        flops=N * (2 * (B * S) * W * D + 2 * (B * T) * (B * S) * D + 8 * B * T * D),
        transcendentals=N * B * T,
        bytes_accessed=4 * (B * S * W + W * D + (B * T) * (B * S) + N * B * T * D + N),
    )

    sums = pl.pallas_call(
        _semantic_loss_kernel,
        out_shape=jax.ShapeDtypeStruct((N, 1, 1), jnp.float32),
        grid_spec=pltpu.PrefetchScalarGridSpec(
            num_scalar_prefetch=0,
            grid=(N,),                                           # one step per config entry
            in_specs=[
                pl.BlockSpec((B * S, W), lambda n: (0, 0)),      # shared across entries
                pl.BlockSpec((W, D), lambda n: (0, 0)),
                pl.BlockSpec((B * T, B * S), lambda n: (0, 0)),
                pl.BlockSpec((1, B * T, D), lambda n: (n, 0, 0)),
            ],
            out_specs=pl.BlockSpec((1, 1, 1), lambda n: (n, 0, 0)),
        ),
        compiler_params=pltpu.CompilerParams(
            dimension_semantics=("parallel",)),                  # v7x: shard entries on 2 TCs
        cost_estimate=cost,
    )(feat_flat, jnp.asarray(c), jnp.asarray(r_bd), emb_flat)

    return sums.reshape(N)


def semantic_loss(semantic_features: jnp.ndarray, audio_embeds: jnp.ndarray) -> jnp.ndarray:
    """semantic_features: (B, S, W) f32, audio_embeds: (B, T, D) f32 -> scalar f32."""
    B, T, _ = audio_embeds.shape
    sums = _semantic_loss_sums(semantic_features, audio_embeds[None])
    # encoder_loss = masked_feature_loss.sum() / loss_mask.sum(), mask == ones(B, T)
    return sums[0] / jnp.float32(B * T)


def encoder_loss(semantic_features, audio_embeds_list,
                 config=({"type": "semantic", "weight": 1.0},)):
    """Mirrors EncoderLoss.forward: returns {loss_type: (loss, weight)}.
    All config entries are evaluated in a single pallas_call."""
    assert len(config) <= len(audio_embeds_list)
    for item in config:
        assert item["type"] == "semantic", f"Invalid loss type: {item['type']}"
    n = len(config)
    stack = jnp.stack([audio_embeds_list[i] for i in range(n)], axis=0)   # (N, B, T, D)
    B, T = stack.shape[1], stack.shape[2]
    sums = _semantic_loss_sums(semantic_features, stack)
    losses = sums / jnp.float32(B * T)
    return {config[i]["type"]: (losses[i], config[i]["weight"]) for i in range(n)}


def _semantic_loss_ref(semantic_features, audio_embeds):
    """Pure-JAX reference with torch cosine_similarity semantics
    (clamp on the product of norms, eps = 1e-8)."""
    B, S, W = semantic_features.shape
    _, T, D = audio_embeds.shape
    r = jnp.asarray(_bilinear_interp_matrix(T, S))
    c = jnp.asarray(_bilinear_interp_matrix(D, W).T)
    resized = jnp.einsum("ts,bsw,wd->btd", r, semantic_features, c)
    dot = jnp.sum(resized * audio_embeds, axis=-1)
    n1sq = jnp.sum(resized * resized, axis=-1)
    n2sq = jnp.sum(audio_embeds * audio_embeds, axis=-1)
    cos = dot / jnp.sqrt(jnp.maximum(n1sq * n2sq, 1e-16))
    return jnp.mean(1.0 - cos)


if __name__ == "__main__":
    key = jax.random.PRNGKey(0)
    k1, k2 = jax.random.split(key)

    B, S, W = 2, 12, 24      # synthetic "hidden_states[17]" shape
    T, D = 8, 32             # audio_embeds (target) shape

    semantic_features = jax.random.normal(k1, (B, S, W), dtype=jnp.float32)
    audio_embeds = jax.random.normal(k2, (B, T, D), dtype=jnp.float32)

    loss_dict = encoder_loss(semantic_features, [audio_embeds])
    loss, weight = loss_dict["semantic"]
    loss = jax.block_until_ready(loss)
    ref = jax.block_until_ready(_semantic_loss_ref(semantic_features, audio_embeds))

    assert jnp.isfinite(loss)
    assert jnp.allclose(loss, ref, rtol=1e-5, atol=1e-5), (loss, ref)
    print("KERNEL_OK")
</pallas_src>

<mosaic_0001>
module attributes {stable_mosaic.version = 11 : i64} {
  func.func @_semantic_loss_kernel(%arg0: i32, %arg1: memref<24x24xf32, #tpu.memory_space<vmem>>, %arg2: memref<24x32xf32, #tpu.memory_space<vmem>>, %arg3: memref<16x24xf32, #tpu.memory_space<vmem>>, %arg4: memref<1x16x32xf32, #tpu.memory_space<vmem>>, %arg5: memref<1x1x1xf32, #tpu.memory_space<vmem>>) attributes {dimension_semantics = [#tpu.dimension_semantics<parallel>], iteration_bounds = array<i64: 1>, scalar_prefetch = 0 : i64, scratch_operands = 0 : i64, tpu.core_type = #tpu.core_type<tc>, window_params = [{pipeline_mode = #tpu.pipeline_mode<synchronous>, transform_indices = @transform_0, window_bounds = array<i64: 24, 24>}, {pipeline_mode = #tpu.pipeline_mode<synchronous>, transform_indices = @transform_1, window_bounds = array<i64: 24, 32>}, {pipeline_mode = #tpu.pipeline_mode<synchronous>, transform_indices = @transform_2, window_bounds = array<i64: 16, 24>}, {transform_indices = @transform_3, window_bounds = array<i64: 1, 16, 32>}, {transform_indices = @transform_4, window_bounds = array<i64: 1, 1, 1>}]} {
    %c0 = arith.constant 0 : index
    %c0_0 = arith.constant 0 : index
    %0 = vector.load %arg1[%c0, %c0_0] : memref<24x24xf32, #tpu.memory_space<vmem>>, vector<24x24xf32>
    %c0_1 = arith.constant 0 : index
    %c0_2 = arith.constant 0 : index
    %1 = vector.load %arg2[%c0_1, %c0_2] : memref<24x32xf32, #tpu.memory_space<vmem>>, vector<24x32xf32>
    %cst = arith.constant dense<0.000000e+00> : vector<24x32xf32>
    %2 = tpu.matmul %0, %1, %cst {dimension_numbers = #tpu.dot_dimension_numbers<[1], [0], [0], [1], [0, 0, 1, 1], [], []>} : vector<24x24xf32>, vector<24x32xf32>, vector<24x32xf32> -> vector<24x32xf32>
    %c0_3 = arith.constant 0 : index
    %c0_4 = arith.constant 0 : index
    %3 = vector.load %arg3[%c0_3, %c0_4] : memref<16x24xf32, #tpu.memory_space<vmem>>, vector<16x24xf32>
    %cst_5 = arith.constant dense<0.000000e+00> : vector<16x32xf32>
    %4 = tpu.matmul %3, %2, %cst_5 {dimension_numbers = #tpu.dot_dimension_numbers<[1], [0], [0], [1], [0, 0, 1, 1], [], []>} : vector<16x24xf32>, vector<24x32xf32>, vector<16x32xf32> -> vector<16x32xf32>
    %c0_6 = arith.constant 0 : index
    %c0_7 = arith.constant 0 : index
    %c0_8 = arith.constant 0 : index
    %5 = vector.load %arg4[%c0_6, %c0_7, %c0_8] : memref<1x16x32xf32, #tpu.memory_space<vmem>>, vector<1x16x32xf32>
    %6 = vector.shape_cast %5 : vector<1x16x32xf32> to vector<16x32xf32>
    %7 = arith.mulf %4, %6 : vector<16x32xf32>
    %cst_9 = arith.constant dense<0.000000e+00> : vector<16xf32>
    %8 = vector.multi_reduction <add>, %7, %cst_9 [1] : vector<16x32xf32> to vector<16xf32>
    %9 = vector.shape_cast %8 : vector<16xf32> to vector<16x1xf32>
    %10 = arith.mulf %4, %4 : vector<16x32xf32>
    %cst_10 = arith.constant dense<0.000000e+00> : vector<16xf32>
    %11 = vector.multi_reduction <add>, %10, %cst_10 [1] : vector<16x32xf32> to vector<16xf32>
    %12 = vector.shape_cast %11 : vector<16xf32> to vector<16x1xf32>
    %13 = arith.mulf %6, %6 : vector<16x32xf32>
    %cst_11 = arith.constant dense<0.000000e+00> : vector<16xf32>
    %14 = vector.multi_reduction <add>, %13, %cst_11 [1] : vector<16x32xf32> to vector<16xf32>
    %15 = vector.shape_cast %14 : vector<16xf32> to vector<16x1xf32>
    %16 = arith.mulf %12, %15 : vector<16x1xf32>
    %cst_12 = arith.constant 1.000000e-16 : f32
    %17 = vector.broadcast %cst_12 : f32 to vector<16x1xf32>
    %18 = arith.maximumf %16, %17 : vector<16x1xf32>
    %19 = math.rsqrt %18 : vector<16x1xf32>
    %20 = arith.mulf %9, %19 : vector<16x1xf32>
    %cst_13 = arith.constant 1.000000e+00 : f32
    %21 = vector.broadcast %cst_13 : f32 to vector<16x1xf32>
    %22 = arith.subf %21, %20 : vector<16x1xf32>
    %23 = vector.shape_cast %22 : vector<16x1xf32> to vector<1x16x1xf32>
    %cst_14 = arith.constant dense<0.000000e+00> : vector<1xf32>
    %24 = vector.multi_reduction <add>, %23, %cst_14 [1, 2] : vector<1x16x1xf32> to vector<1xf32>
    %25 = vector.shape_cast %24 : vector<1xf32> to vector<1x1x1xf32>
    %26 = vector.extract %25[0, 0, 0] : f32 from vector<1x1x1xf32>
    %27 = vector.broadcast %26 : f32 to vector<1x1xf32>
    %c0_15 = arith.constant 0 : index
    %c0_16 = arith.constant 0 : index
    %c0_17 = arith.constant 0 : index
    %28 = vector.load %arg5[%c0_15, %c0_16, %c0_17] : memref<1x1x1xf32, #tpu.memory_space<vmem>>, vector<1x1x1xf32>
    %29 = vector.shape_cast %28 : vector<1x1x1xf32> to vector<1x1xf32>
    %30 = vector.shape_cast %27 : vector<1x1xf32> to vector<1x1x1xf32>
    tpu.vector_store %arg5[%c0_15, %c0_16, %c0_17], %30 {strides = array<i32>} : memref<1x1x1xf32, #tpu.memory_space<vmem>>, vector<1x1x1xf32>,
    return
  }
  func.func @transform_0(%arg0: i32) -> (i32, i32) {
    %c0_i32 = arith.constant 0 : i32
    %c0_i32_0 = arith.constant 0 : i32
    %c0_i32_1 = arith.constant 0 : i32
    return %c0_i32, %c0_i32_0 : i32, i32
  }
  func.func @transform_1(%arg0: i32) -> (i32, i32) {
    %c0_i32 = arith.constant 0 : i32
    %c0_i32_0 = arith.constant 0 : i32
    %c0_i32_1 = arith.constant 0 : i32
    return %c0_i32, %c0_i32_0 : i32, i32
  }
  func.func @transform_2(%arg0: i32) -> (i32, i32) {
    %c0_i32 = arith.constant 0 : i32
    %c0_i32_0 = arith.constant 0 : i32
    %c0_i32_1 = arith.constant 0 : i32
    return %c0_i32, %c0_i32_0 : i32, i32
  }
  func.func @transform_3(%arg0: i32) -> (i32, i32, i32) {
    %c0_i32 = arith.constant 0 : i32
    %c0_i32_0 = arith.constant 0 : i32
    %c0_i32_1 = arith.constant 0 : i32
    return %arg0, %c0_i32, %c0_i32_0 : i32, i32, i32
  }
  func.func @transform_4(%arg0: i32) -> (i32, i32, i32) {
    %c0_i32 = arith.constant 0 : i32
    %c0_i32_0 = arith.constant 0 : i32
    %c0_i32_1 = arith.constant 0 : i32
    return %arg0, %c0_i32, %c0_i32_0 : i32, i32, i32
  }
}

</mosaic_0001>

<llo_original>
// kernel: _semantic_loss_sums.1
$region0: #{_semantic_loss_sums.1}
  #allocation0 [shape = 'u32[]', space=smem, size = 0x4, offset = 0x4, fixed_abs, tag = 'smem constant byte address 0x4 - core index']
  #allocation1 [shape = 'u32[144,128]{1,0:T(1,128)}', space=vmem, size = 0x12000, scoped, tag = 'internal scratch']
  %s0 = inlined_call_operand.vmem [shape: f32[24,24], index: 0, kind: input, shape index: {}]
  %s1 = inlined_call_operand.vmem [shape: f32[24,32], index: 1, kind: input, shape index: {}]
  %s2 = inlined_call_operand.vmem [shape: f32[16,24], index: 2, kind: input, shape index: {}]
  %s3 = inlined_call_operand.vmem [shape: f32[1,16,32], index: 3, kind: input, shape index: {}]
  %s4 = inlined_call_operand.hbm [shape: f32[1,1,1], index: 4, kind: output, shape index: {}]
  %s5 = sld [smem:[#allocation0]]
  $region26: #{_semantic_loss_sums.1} parent=0
    _
  %s7 = ssub.s32 1, %s5
  %s8 = scalar_select 0, %s7, %s5
  $region1: #{_semantic_loss_sums.1} parent=0
    #allocation2 [shape = 'u8[512]{0}', space=vmem, size = 0x400, scoped, tag = 'output window, operand 0, single buffered']
    #allocation3 [shape = 's32[1]{0}', space=sflag, size = 0x4, scoped, tag = 'scoped memory for _semantic_loss_sums.1']
    %9 = vsyncpa [#allocation3], 0
    // Predicated region
    $region2: #{_semantic_loss_sums.1} parent=1 // pred_check
      _
    $region3: #{_semantic_loss_sums.1} parent=1 // pred_check_branch
      %11 = sbr.rel (0) target = $region5
    $region4: #{_semantic_loss_sums.1} parent=1 // pred_region
      _
    $region5: #{_semantic_loss_sums.1} parent=1 // pred_fallthru
      _
    // Predicated region
    $region6: #{_semantic_loss_sums.1} parent=1 // pred_check
      _
    $region7: #{_semantic_loss_sums.1} parent=1 // pred_check_branch
      %13 = sbr.rel (0) target = $region9
    $region8: #{_semantic_loss_sums.1} parent=1 // pred_region
      _
    $region9: #{_semantic_loss_sums.1} parent=1 // pred_fallthru
      _
    // Predicated region
    $region10: #{_semantic_loss_sums.1} parent=1 // pred_check
      _
    $region11: #{_semantic_loss_sums.1} parent=1 // pred_check_branch
      %15 = sbr.rel (0) target = $region13
    $region12: #{_semantic_loss_sums.1} parent=1 // pred_region
      _
    $region13: #{_semantic_loss_sums.1} parent=1 // pred_fallthru
      _
    // Predicated region
    $region14: #{_semantic_loss_sums.1} parent=1 // pred_check
      _
    $region15: #{_semantic_loss_sums.1} parent=1 // pred_check_branch
      %17 = sbr.rel (0) target = $region17
    $region16: #{_semantic_loss_sums.1} parent=1 // pred_region
      _
    $region17: #{_semantic_loss_sums.1} parent=1 // pred_fallthru
      _
    %v18 = vld [vmem:[%s0] sm:$0xff]
    %v19 = vld [vmem:[%s0 + $0x8] sm:$0xff]
    %v20 = vld [vmem:[%s0 + $0x10] sm:$0xff]
    %v21 = vld [vmem:[%s1] sm:$0xff]
    %v22 = vld [vmem:[%s1 + $0x8] sm:$0xff]
    %v23 = vld [vmem:[%s1 + $0x10] sm:$0xff]
    %vm24 = vcmask 195584
    %v26 = vsel %vm24, %v18, 0
    %v29 = vsel %vm24, %v19, 0
    %v32 = vsel %vm24, %v20, 0
    %34 = vmatprep.subr.mxu0 0.0
    %35 = vmatpush1.msra.mxu0 %v21
    %36 = vmatprep.subr.mxu0 0.0
    %37 = vmatpush1.msra.mxu0 %v22
    %38 = vmatprep.subr.mxu0 0.0
    %39 = vmatpush1.msra.mxu0 %v23
    %40 = vmatprep.subr.mxu0 0.0
    %41 = vmatpush1.msra.mxu0 0.0
    %42 = vmatprep.subr.mxu0 0.0
    %43 = vmatpush1.msra.mxu0 0.0
    %44 = vmatprep.subr.mxu0 0.0
    %45 = vmatpush1.msra.mxu0 0.0
    %46 = vmatprep.subr.mxu0 0.0
    %47 = vmatpush1.msra.mxu0 0.0
    %48 = vmatprep.subr.mxu0 0.0
    %49 = vmatpush1.msra.mxu0 0.0
    %50 = vmatprep.subr.mxu0 0.0
    %51 = vmatpush1.msra.mxu0 0.0
    %52 = vmatprep.subr.mxu0 0.0
    %53 = vmatpush1.msra.mxu0 0.0
    %54 = vmatprep.subr.mxu0 0.0
    %55 = vmatpush1.msra.mxu0 0.0
    %56 = vmatprep.subr.mxu0 0.0
    %57 = vmatpush1.msra.mxu0 0.0
    %58 = vmatprep.subr.mxu0 0.0
    %59 = vmatpush1.msra.mxu0 0.0
    %60 = vmatprep.subr.mxu0 0.0
    %61 = vmatpush1.msra.mxu0 0.0
    %62 = vmatprep.subr.mxu0 0.0
    %63 = vmatpush1.msra.mxu0 0.0
    %64 = vmatprep.subr.mxu0 0.0
    %65 = vmatpush1.msra.mxu0 0.0
    %66 = vmatprep.subr.mxu0 0.0
    %67 = vmatpush1.msra.mxu0 0.0
    %68 = vmatprep.subr.mxu0 0.0
    %69 = vmatpush1.msra.mxu0 0.0
    %70 = vmatprep.subr.mxu0 0.0
    %71 = vmatpush1.msra.mxu0 0.0
    %72 = vmatprep.subr.mxu0 0.0
    %73 = vmatpush1.msra.mxu0 0.0
    %74 = vmatprep.subr.mxu0 0.0
    %75 = vmatpush1.msra.mxu0 0.0
    %76 = vmatprep.subr.mxu0 0.0
    %77 = vmatpush1.msra.mxu0 0.0
    %78 = vmatprep.subr.mxu0 0.0
    %79 = vmatpush1.msra.mxu0 0.0
    %80 = vmatprep.subr.mxu0 0.0
    %81 = vmatpush1.msra.mxu0 0.0
    %82 = vmatprep.subr.mxu0 0.0
    %83 = vmatpush1.msra.mxu0 0.0
    %84 = vmatprep.subr.mxu0 0.0
    %85 = vmatpush1.msra.mxu0 0.0
    %86 = vmatprep.subr.mxu0 0.0
    %87 = vmatpush1.msra.mxu0 0.0
    %88 = vmatprep.subr.mxu0 0.0
    %89 = vmatpush1.msra.mxu0 0.0
    %90 = vmatprep.subr.mxu0 0.0
    %91 = vmatpush1.msra.mxu0 0.0
    %92 = vmatprep.subr.mxu0 0.0
    %93 = vmatpush1.msra.mxu0 0.0
    %94 = vmatprep.subr.mxu0 0.0
    %95 = vmatpush1.msra.mxu0 0.0
    %96 = vmatprep.subr.mxu0 0.0
    %97 = vmatpush1.msra.mxu0 0.0
    %98 = vmatprep.mubr.f32.mxu0 0.0
    %99 = vmatmul.mubr.f32.gmra.mrb[0].mxu0 %v26
    %v100 = vpop.f32.mrb[0].mxu0
    %v101 = vadd.f32 0.0, %v100
    %v102 = vpop.f32.mrb[0].mxu0
    %103 = vmatprep.mubr.f32.mxu0 0.0
    %104 = vmatmul.mubr.f32.gmra.mrb[0].mxu0 %v29
    %v105 = vpop.f32.mrb[0].mxu0
    %v106 = vadd.f32 0.0, %v105
    %v107 = vpop.f32.mrb[0].mxu0
    %108 = vmatprep.mubr.f32.mxu0 0.0
    %109 = vmatmul.mubr.f32.gmra.mrb[0].mxu0 %v32
    %v110 = vpop.f32.mrb[0].mxu0
    %v111 = vadd.f32 0.0, %v110
    %v112 = vpop.f32.mrb[0].mxu0
    %113 = vdwg.mxu0
    %v114 = vld [vmem:[%s2] sm:$0xff]
    %v115 = vld [vmem:[%s2 + $0x8] sm:$0xff]
    %v117 = vsel %vm24, %v114, 0
    %v120 = vsel %vm24, %v115, 0
    %122 = vmatprep.subr.mxu0 0.0
    %123 = vmatpush1.msra.mxu0 %v101
    %124 = vmatprep.subr.mxu0 0.0
    %125 = vmatpush1.msra.mxu0 %v106
    %126 = vmatprep.subr.mxu0 0.0
    %127 = vmatpush1.msra.mxu0 %v111
    %128 = vmatprep.subr.mxu0 0.0
    %129 = vmatpush1.msra.mxu0 0.0
    %130 = vmatprep.subr.mxu0 0.0
    %131 = vmatpush1.msra.mxu0 0.0
    %132 = vmatprep.subr.mxu0 0.0
    %133 = vmatpush1.msra.mxu0 0.0
    %134 = vmatprep.subr.mxu0 0.0
    %135 = vmatpush1.msra.mxu0 0.0
    %136 = vmatprep.subr.mxu0 0.0
    %137 = vmatpush1.msra.mxu0 0.0
    %138 = vmatprep.subr.mxu0 0.0
    %139 = vmatpush1.msra.mxu0 0.0
    %140 = vmatprep.subr.mxu0 0.0
    %141 = vmatpush1.msra.mxu0 0.0
    %142 = vmatprep.subr.mxu0 0.0
    %143 = vmatpush1.msra.mxu0 0.0
    %144 = vmatprep.subr.mxu0 0.0
    %145 = vmatpush1.msra.mxu0 0.0
    %146 = vmatprep.subr.mxu0 0.0
    %147 = vmatpush1.msra.mxu0 0.0
    %148 = vmatprep.subr.mxu0 0.0
    %149 = vmatpush1.msra.mxu0 0.0
    %150 = vmatprep.subr.mxu0 0.0
    %151 = vmatpush1.msra.mxu0 0.0
    %152 = vmatprep.subr.mxu0 0.0
    %153 = vmatpush1.msra.mxu0 0.0
    %154 = vmatprep.subr.mxu0 0.0
    %155 = vmatpush1.msra.mxu0 0.0
    %156 = vmatprep.subr.mxu0 0.0
    %157 = vmatpush1.msra.mxu0 0.0
    %158 = vmatprep.subr.mxu0 0.0
    %159 = vmatpush1.msra.mxu0 0.0
    %160 = vmatprep.subr.mxu0 0.0
    %161 = vmatpush1.msra.mxu0 0.0
    %162 = vmatprep.subr.mxu0 0.0
    %163 = vmatpush1.msra.mxu0 0.0
    %164 = vmatprep.subr.mxu0 0.0
    %165 = vmatpush1.msra.mxu0 0.0
    %166 = vmatprep.subr.mxu0 0.0
    %167 = vmatpush1.msra.mxu0 0.0
    %168 = vmatprep.subr.mxu0 0.0
    %169 = vmatpush1.msra.mxu0 0.0
    %170 = vmatprep.subr.mxu0 0.0
    %171 = vmatpush1.msra.mxu0 0.0
    %172 = vmatprep.subr.mxu0 0.0
    %173 = vmatpush1.msra.mxu0 0.0
    %174 = vmatprep.subr.mxu0 0.0
    %175 = vmatpush1.msra.mxu0 0.0
    %176 = vmatprep.subr.mxu0 0.0
    %177 = vmatpush1.msra.mxu0 0.0
    %178 = vmatprep.subr.mxu0 0.0
    %179 = vmatpush1.msra.mxu0 0.0
    %180 = vmatprep.subr.mxu0 0.0
    %181 = vmatpush1.msra.mxu0 0.0
    %182 = vmatprep.subr.mxu0 0.0
    %183 = vmatpush1.msra.mxu0 0.0
    %184 = vmatprep.subr.mxu0 0.0
    %185 = vmatpush1.msra.mxu0 0.0
    %186 = vmatprep.mubr.f32.mxu0 0.0
    %187 = vmatmul.mubr.f32.gmra.mrb[0].mxu0 %v117
    %v188 = vpop.f32.mrb[0].mxu0
    %v189 = vadd.f32 0.0, %v188
    %v190 = vpop.f32.mrb[0].mxu0
    %191 = vmatprep.mubr.f32.mxu0 0.0
    %192 = vmatmul.mubr.f32.gmra.mrb[0].mxu0 %v120
    %v193 = vpop.f32.mrb[0].mxu0
    %v194 = vadd.f32 0.0, %v193
    %v195 = vpop.f32.mrb[0].mxu0
    %196 = vdwg.mxu0
    %v197 = vld [vmem:[%s3] sm:$0xff]
    %v198 = vld [vmem:[%s3 + $0x8] sm:$0xff]
    %v199 = vmul.f32 %v189, %v197
    %v200 = vmul.f32 %v194, %v198
    %vm201 = vcmask 261120
    %v202 = vsel %vm201, %v199, 0.0
    %203 = vadd.xlane.f32.xlu0 %v202
    %v204 = vpop.xlane.xlu0 %203
    %v205 = vsel %vm201, %v200, 0.0
    %206 = vadd.xlane.f32.xlu0 %v205
    %v207 = vpop.xlane.xlu0 %206
    %v208 = vmul.f32 %v189, %v189
    %v209 = vmul.f32 %v194, %v194
    %v210 = vsel %vm201, %v208, 0.0
    %211 = vadd.xlane.f32.xlu0 %v210
    %v212 = vpop.xlane.xlu0 %211
    %v213 = vsel %vm201, %v209, 0.0
    %214 = vadd.xlane.f32.xlu0 %v213
    %v215 = vpop.xlane.xlu0 %214
    %v216 = vmul.f32 %v197, %v197
    %v217 = vmul.f32 %v198, %v198
    %v218 = vsel %vm201, %v216, 0.0
    %219 = vadd.xlane.f32.xlu0 %v218
    %v220 = vpop.xlane.xlu0 %219
    %v221 = vsel %vm201, %v217, 0.0
    %222 = vadd.xlane.f32.xlu0 %v221
    %v223 = vpop.xlane.xlu0 %222
    %v224 = vmul.f32 %v212, %v220
    %v225 = vmul.f32 %v215, %v223
    %v226 = vmax.f32 %v224, 1e-16
    %v227 = vmax.f32 %v225, 1e-16
    %v228 = vrsqrt.pop %v226
    %v229 = vrsqrt.pop %v227
    %v230 = vmul.f32 %v204, %v228
    %v231 = vmul.f32 %v207, %v229
    %v232 = vsub.f32 1.0, %v230
    %v233 = vsub.f32 1.0, %v231
    %vm234 = vcmask 7168
    %v235 = vsel %vm234, %v232, 0.0
    %v236 = vsel %vm234, %v233, 0.0
    %v237 = vadd.f32 %v235, %v236
    %238 = vadd.xlane.f32.xlu0 %v237
    %v239 = vpop.xlane.xlu0 %238
    %v240 = vrot.slane %v239, 4
    %v241 = vadd.f32 %v239, %v240
    %v242 = vrot.slane %v241, 2
    %v243 = vadd.f32 %v241, %v242
    %v244 = vrot.slane %v243, 1
    %v245 = vadd.f32 %v243, %v244
    %s246 = vtos %v245
    %v247 = vstv %s246
    %vm248 = vcmask 0
    %249 = vst.msk [vmem:[#allocation2] sm:$0x1] %vm248, %v247
    // Predicated region
    $region18: #{_semantic_loss_sums.1} parent=1 // pred_check
      _
    $region19: #{_semantic_loss_sums.1} parent=1 // pred_check_branch
      %251 = sbr.rel (0) target = $region21
    $region20: #{_semantic_loss_sums.1} parent=1 // pred_region
      %s253 = ssub.s32 16, 16
      %254 = vsyncadd [#allocation3], %s253
      %s256 = sshll.u32 [#allocation2], 4
      %s257 = int_to_ptr.vmem [resolvable:$true] %s256
      %259 = dma.vmem_to_hbm [thread:$0]  %s257, 16, %s4, [#allocation3]
    $region21: #{_semantic_loss_sums.1} parent=1 // pred_fallthru
      _
    // Predicated region
    $region22: #{_semantic_loss_sums.1} parent=1 // pred_check
      _
    $region23: #{_semantic_loss_sums.1} parent=1 // pred_check_branch
      %261 = sbr.rel (0) target = $region25
    $region24: #{_semantic_loss_sums.1} parent=1 // pred_region
      %262 = dma.done [#allocation3], 16
    $region25: #{_semantic_loss_sums.1} parent=1 // pred_fallthru
      _
    %263 = vsyncpa [#allocation3], 1

</llo_original>
